<compile_context>
chip_gen: v7x
topology: tpu7x:2x2x1
jax: 0.10.0
libtpu: 0.0.40
codegen_flags: <defaults>
</compile_context>

<pallas_src>
import functools

import jax
import jax.numpy as jnp
from jax.experimental import pallas as pl
from jax.experimental.pallas import tpu as pltpu


def _cbam_kernel(x_ref, w1t_ref, w2t_ref, wsp_ref, o_ref, *, kernel_size):
    # x_ref: (Bb, C, L); w1t: (C, Ch); w2t: (Ch, C); wsp (SMEM): (2, K)
    x = x_ref[...].astype(jnp.float32)                    # (Bb, C, L)
    Bb, C, L = x.shape
    pad = kernel_size // 2

    # ---------------- Channel attention ----------------
    # AdaptiveAvgPool1d(1) / AdaptiveMaxPool1d(1) == reduce over length L.
    avg_p = jnp.mean(x, axis=2)                           # (Bb, C)
    max_p = jnp.max(x, axis=2)                            # (Bb, C)

    w1t = w1t_ref[...].astype(jnp.float32)                # (C, Ch)
    w2t = w2t_ref[...].astype(jnp.float32)                # (Ch, C)

    def mlp(p):                                           # shared 1x1-conv MLP, batched over Bb
        h = jnp.dot(p, w1t, preferred_element_type=jnp.float32)   # (Bb, Ch)
        h = jnp.maximum(h, 0.0)                                    # ReLU
        return jnp.dot(h, w2t, preferred_element_type=jnp.float32)  # (Bb, C)

    ca = jax.nn.sigmoid(mlp(avg_p) + mlp(max_p))          # (Bb, C)
    out1 = x * ca[:, :, None]                             # (Bb, C, L) channel-scaled

    # ---------------- Spatial attention ----------------
    mean_s = jnp.mean(out1, axis=1)                       # (Bb, L)
    max_s = jnp.max(out1, axis=1)                         # (Bb, L)

    lane = jax.lax.broadcasted_iota(jnp.int32, (Bb, L), dimension=1)
    acc = jnp.zeros((Bb, L), jnp.float32)
    # "same" zero-padded cross-correlation, K static taps: lane rotation (XLU) + edge mask
    # instead of pad-concat + misaligned lane slices.
    for k in range(kernel_size):
        off = k - pad                                      # out[l] uses in[l + off]
        shift = (-off) % L
        if shift:
            m_sh = pltpu.roll(mean_s, shift, axis=1)
            x_sh = pltpu.roll(max_s, shift, axis=1)
        else:
            m_sh, x_sh = mean_s, max_s
        tap = m_sh * wsp_ref[0, k] + x_sh * wsp_ref[1, k]  # scalar taps from SMEM
        src = lane + off
        valid = jnp.logical_and(src >= 0, src < L)
        acc = acc + jnp.where(valid, tap, 0.0)

    sa = jax.nn.sigmoid(acc)                               # (Bb, L)
    o_ref[...] = (out1 * sa[:, None, :]).astype(o_ref.dtype)


def _pick_block_batch(B, C, L, in_itemsize, vmem_limit_bytes):
    """Largest divisor of B whose block fits the VMEM budget, keeping >= 2 grid steps."""
    # Approximate live VMEM per batch row per grid step:
    #   double-buffered in + out blocks : 4 * C * L * in_itemsize
    #   ~3 f32 compute temporaries      : 3 * C * L * 4
    per_batch = C * L * (4 * in_itemsize + 3 * 4)
    budget = int(vmem_limit_bytes * 0.8)                   # headroom for weights / scratch
    cap = max(1, budget // per_batch)
    best = 1
    for d in range(1, B + 1):
        if B % d != 0 or d > cap:
            continue
        if B >= 2 and B // d < 2:
            continue   # keep the grid >= 2 so both v7x TensorCores are used
        best = d
    return best


def cbam_pallas(x, w1, w2, wsp, *, kernel_size=7,
                vmem_limit_bytes=48 * 1024 * 1024):
    """x: (B, C, L); w1: (C//r, C); w2: (C, C//r); wsp: (2, K)."""
    assert kernel_size % 2 == 1, "kernel_size must be odd for 'same' padding"
    B, C, L = x.shape
    Ch = w1.shape[0]

    # Pre-transpose the 1x1-conv weights once in the wrapper so the in-kernel
    # matmuls are (Bb, C) @ (C, Ch) and (Bb, Ch) @ (Ch, C) with no in-kernel transpose.
    w1t = jnp.asarray(w1).T                                # (C, Ch)
    w2t = jnp.asarray(w2).T                                # (Ch, C)

    Bb = _pick_block_batch(B, C, L, jnp.dtype(x.dtype).itemsize, vmem_limit_bytes)
    grid = (B // Bb,)

    kernel = functools.partial(_cbam_kernel, kernel_size=kernel_size)

    return pl.pallas_call(
        kernel,
        out_shape=jax.ShapeDtypeStruct((B, C, L), x.dtype),
        grid_spec=pltpu.PrefetchScalarGridSpec(
            num_scalar_prefetch=0,
            grid=grid,
            in_specs=[
                pl.BlockSpec((Bb, C, L), lambda b: (b, 0, 0)),    # x, Bb batch slabs
                pl.BlockSpec((C, Ch), lambda b: (0, 0)),          # fc1 weight (transposed)
                pl.BlockSpec((Ch, C), lambda b: (0, 0)),          # fc2 weight (transposed)
                pl.BlockSpec(memory_space=pltpu.MemorySpace.SMEM),  # spatial conv taps
            ],
            out_specs=pl.BlockSpec((Bb, C, L), lambda b: (b, 0, 0)),
        ),
        compiler_params=pltpu.CompilerParams(
            dimension_semantics=("parallel",),
            vmem_limit_bytes=vmem_limit_bytes,
        ),
    )(x, w1t, w2t, wsp)


def cbam_reference(x, w1, w2, wsp, *, kernel_size=7):
    """Pure-JAX reference matching the PyTorch forward semantics."""
    pad = kernel_size // 2
    # channel attention
    avg_c = jnp.mean(x, axis=2, keepdims=True)             # (B, C, 1)
    max_c = jnp.max(x, axis=2, keepdims=True)              # (B, C, 1)

    def mlp(v):
        h = jnp.einsum('hc,bcl->bhl', w1, v)
        h = jnp.maximum(h, 0.0)
        return jnp.einsum('ch,bhl->bcl', w2, h)

    ca = jax.nn.sigmoid(mlp(avg_c) + mlp(max_c))           # (B, C, 1)
    out1 = x * ca
    # spatial attention
    mean_s = jnp.mean(out1, axis=1, keepdims=True)         # (B, 1, L)
    max_s = jnp.max(out1, axis=1, keepdims=True)           # (B, 1, L)
    cat = jnp.concatenate([mean_s, max_s], axis=1)         # (B, 2, L)
    padded = jnp.pad(cat, ((0, 0), (0, 0), (pad, pad)))
    L = x.shape[2]
    acc = jnp.zeros((x.shape[0], 1, L), jnp.float32)
    for k in range(kernel_size):
        acc = acc + jnp.sum(padded[:, :, k:k + L] * wsp[None, :, k:k + 1],
                            axis=1, keepdims=True)
    sa = jax.nn.sigmoid(acc)
    return out1 * sa


if __name__ == "__main__":
    B, C, L = 4, 16, 256          # L is a multiple of 128 -> lane-dense loads/stores
    ratio, ksize = 8, 7
    Ch = C // ratio

    key = jax.random.PRNGKey(0)
    kx, k1, k2, k3 = jax.random.split(key, 4)

    x = jax.random.normal(kx, (B, C, L), dtype=jnp.float32)
    # Deterministic synthetic parameters (Conv1d 1x1 weights squeezed, spatial conv weight).
    w1 = 0.3 * jax.random.normal(k1, (Ch, C), dtype=jnp.float32)      # fc1: Conv1d(C, C//r, 1)
    w2 = 0.3 * jax.random.normal(k2, (C, Ch), dtype=jnp.float32)      # fc2: Conv1d(C//r, C, 1)
    wsp = 0.3 * jax.random.normal(k3, (2, ksize), dtype=jnp.float32)  # Conv1d(2, 1, 7, pad=3)

    out = cbam_pallas(x, w1, w2, wsp, kernel_size=ksize)
    out = jax.block_until_ready(out)

    ref = cbam_reference(x, w1, w2, wsp, kernel_size=ksize)
    assert out.shape == (B, C, L)
    assert jnp.allclose(out, ref, rtol=1e-3, atol=1e-3), "mismatch vs reference"

    print("KERNEL_OK")
</pallas_src>

<mosaic_0001>
module attributes {stable_mosaic.version = 11 : i64} {
  func.func @_cbam_kernel(%arg0: i32, %arg1: memref<2x16x256xf32, #tpu.memory_space<vmem>>, %arg2: memref<16x2xf32, #tpu.memory_space<vmem>>, %arg3: memref<2x16xf32, #tpu.memory_space<vmem>>, %arg4: memref<2x7xf32, #tpu.memory_space<smem>>, %arg5: memref<2x16x256xf32, #tpu.memory_space<vmem>>) attributes {dimension_semantics = [#tpu.dimension_semantics<parallel>], iteration_bounds = array<i64: 2>, scalar_prefetch = 0 : i64, scratch_operands = 0 : i64, tpu.core_type = #tpu.core_type<tc>, window_params = [{transform_indices = @transform_0, window_bounds = array<i64: 2, 16, 256>}, {pipeline_mode = #tpu.pipeline_mode<synchronous>, transform_indices = @transform_1, window_bounds = array<i64: 16, 2>}, {pipeline_mode = #tpu.pipeline_mode<synchronous>, transform_indices = @transform_2, window_bounds = array<i64: 2, 16>}, {transform_indices = @transform_3, window_bounds = array<i64: 2, 7>}, {transform_indices = @transform_4, window_bounds = array<i64: 2, 16, 256>}]} {
    %c0 = arith.constant 0 : index
    %c0_0 = arith.constant 0 : index
    %c0_1 = arith.constant 0 : index
    %0 = vector.load %arg1[%c0, %c0_0, %c0_1] : memref<2x16x256xf32, #tpu.memory_space<vmem>>, vector<2x16x256xf32>
    %cst = arith.constant dense<0.000000e+00> : vector<2x16xf32>
    %1 = vector.multi_reduction <add>, %0, %cst [2] : vector<2x16x256xf32> to vector<2x16xf32>
    %cst_2 = arith.constant 2.560000e+02 : f32
    %2 = vector.broadcast %cst_2 : f32 to vector<2x16xf32>
    %3 = arith.divf %1, %2 : vector<2x16xf32>
    %cst_3 = arith.constant dense<0xFF800000> : vector<2x16xf32>
    %4 = vector.multi_reduction <maximumf>, %0, %cst_3 [2] : vector<2x16x256xf32> to vector<2x16xf32>
    %c0_4 = arith.constant 0 : index
    %c0_5 = arith.constant 0 : index
    %5 = vector.load %arg2[%c0_4, %c0_5] : memref<16x2xf32, #tpu.memory_space<vmem>>, vector<16x2xf32>
    %c0_6 = arith.constant 0 : index
    %c0_7 = arith.constant 0 : index
    %6 = vector.load %arg3[%c0_6, %c0_7] : memref<2x16xf32, #tpu.memory_space<vmem>>, vector<2x16xf32>
    %cst_8 = arith.constant dense<0.000000e+00> : vector<2x2xf32>
    %7 = tpu.matmul %3, %5, %cst_8 {dimension_numbers = #tpu.dot_dimension_numbers<[1], [0], [0], [1], [0, 0, 1, 1], [], []>} : vector<2x16xf32>, vector<16x2xf32>, vector<2x2xf32> -> vector<2x2xf32>
    %cst_9 = arith.constant 0.000000e+00 : f32
    %8 = vector.broadcast %cst_9 : f32 to vector<2x2xf32>
    %9 = arith.maximumf %7, %8 : vector<2x2xf32>
    %cst_10 = arith.constant dense<0.000000e+00> : vector<2x16xf32>
    %10 = tpu.matmul %9, %6, %cst_10 {dimension_numbers = #tpu.dot_dimension_numbers<[1], [0], [0], [1], [0, 0, 1, 1], [], []>} : vector<2x2xf32>, vector<2x16xf32>, vector<2x16xf32> -> vector<2x16xf32>
    %cst_11 = arith.constant dense<0.000000e+00> : vector<2x2xf32>
    %11 = tpu.matmul %4, %5, %cst_11 {dimension_numbers = #tpu.dot_dimension_numbers<[1], [0], [0], [1], [0, 0, 1, 1], [], []>} : vector<2x16xf32>, vector<16x2xf32>, vector<2x2xf32> -> vector<2x2xf32>
    %cst_12 = arith.constant 0.000000e+00 : f32
    %12 = vector.broadcast %cst_12 : f32 to vector<2x2xf32>
    %13 = arith.maximumf %11, %12 : vector<2x2xf32>
    %cst_13 = arith.constant dense<0.000000e+00> : vector<2x16xf32>
    %14 = tpu.matmul %13, %6, %cst_13 {dimension_numbers = #tpu.dot_dimension_numbers<[1], [0], [0], [1], [0, 0, 1, 1], [], []>} : vector<2x2xf32>, vector<2x16xf32>, vector<2x16xf32> -> vector<2x16xf32>
    %15 = arith.addf %10, %14 : vector<2x16xf32>
    %16 = arith.negf %15 : vector<2x16xf32>
    %17 = math.exp %16 : vector<2x16xf32>
    %cst_14 = arith.constant 1.000000e+00 : f32
    %18 = vector.broadcast %cst_14 : f32 to vector<2x16xf32>
    %19 = arith.addf %18, %17 : vector<2x16xf32>
    %20 = arith.divf %18, %19 : vector<2x16xf32>
    %21 = vector.shape_cast %20 : vector<2x16xf32> to vector<2x16x1xf32>
    %22 = vector.broadcast %21 : vector<2x16x1xf32> to vector<2x16x256xf32>
    %23 = arith.mulf %0, %22 : vector<2x16x256xf32>
    %cst_15 = arith.constant dense<0.000000e+00> : vector<2x256xf32>
    %24 = vector.multi_reduction <add>, %23, %cst_15 [1] : vector<2x16x256xf32> to vector<2x256xf32>
    %cst_16 = arith.constant 1.600000e+01 : f32
    %25 = vector.broadcast %cst_16 : f32 to vector<2x256xf32>
    %26 = arith.divf %24, %25 : vector<2x256xf32>
    %cst_17 = arith.constant dense<0xFF800000> : vector<2x256xf32>
    %27 = vector.multi_reduction <maximumf>, %23, %cst_17 [1] : vector<2x16x256xf32> to vector<2x256xf32>
    %28 = tpu.iota {dimensions = array<i32: 1>} : vector<2x256xi32>
    %cst_18 = arith.constant 0.000000e+00 : f32
    %29 = vector.broadcast %cst_18 : f32 to vector<2x256xf32>
    %c3_i32 = arith.constant 3 : i32
    %30 = tpu.dynamic_rotate %26 by %c3_i32 dim 1 : vector<2x256xf32>, i32 -> vector<2x256xf32>
    %c3_i32_19 = arith.constant 3 : i32
    %31 = tpu.dynamic_rotate %27 by %c3_i32_19 dim 1 : vector<2x256xf32>, i32 -> vector<2x256xf32>
    %c0_20 = arith.constant 0 : index
    %c0_21 = arith.constant 0 : index
    %32 = memref.load %arg4[%c0_20, %c0_21] : memref<2x7xf32, #tpu.memory_space<smem>>
    %33 = vector.broadcast %32 : f32 to vector<2x256xf32>
    %34 = arith.mulf %30, %33 : vector<2x256xf32>
    %c1 = arith.constant 1 : index
    %c0_22 = arith.constant 0 : index
    %35 = memref.load %arg4[%c1, %c0_22] : memref<2x7xf32, #tpu.memory_space<smem>>
    %36 = vector.broadcast %35 : f32 to vector<2x256xf32>
    %37 = arith.mulf %31, %36 : vector<2x256xf32>
    %38 = arith.addf %34, %37 : vector<2x256xf32>
    %c-3_i32 = arith.constant -3 : i32
    %39 = vector.broadcast %c-3_i32 : i32 to vector<2x256xi32>
    %40 = arith.addi %28, %39 : vector<2x256xi32>
    %c0_i32 = arith.constant 0 : i32
    %41 = vector.broadcast %c0_i32 : i32 to vector<2x256xi32>
    %42 = arith.cmpi sge, %40, %41 : vector<2x256xi32>
    %c256_i32 = arith.constant 256 : i32
    %43 = vector.broadcast %c256_i32 : i32 to vector<2x256xi32>
    %44 = arith.cmpi slt, %40, %43 : vector<2x256xi32>
    %45 = arith.andi %42, %44 : vector<2x256xi1>
    %cst_23 = arith.constant 0.000000e+00 : f32
    %46 = vector.broadcast %cst_23 : f32 to vector<2x256xf32>
    %47 = arith.select %45, %38, %46 : vector<2x256xi1>, vector<2x256xf32>
    %48 = arith.addf %29, %47 : vector<2x256xf32>
    %c2_i32 = arith.constant 2 : i32
    %49 = tpu.dynamic_rotate %26 by %c2_i32 dim 1 : vector<2x256xf32>, i32 -> vector<2x256xf32>
    %c2_i32_24 = arith.constant 2 : i32
    %50 = tpu.dynamic_rotate %27 by %c2_i32_24 dim 1 : vector<2x256xf32>, i32 -> vector<2x256xf32>
    %c0_25 = arith.constant 0 : index
    %c1_26 = arith.constant 1 : index
    %51 = memref.load %arg4[%c0_25, %c1_26] : memref<2x7xf32, #tpu.memory_space<smem>>
    %52 = vector.broadcast %51 : f32 to vector<2x256xf32>
    %53 = arith.mulf %49, %52 : vector<2x256xf32>
    %c1_27 = arith.constant 1 : index
    %c1_28 = arith.constant 1 : index
    %54 = memref.load %arg4[%c1_27, %c1_28] : memref<2x7xf32, #tpu.memory_space<smem>>
    %55 = vector.broadcast %54 : f32 to vector<2x256xf32>
    %56 = arith.mulf %50, %55 : vector<2x256xf32>
    %57 = arith.addf %53, %56 : vector<2x256xf32>
    %c-2_i32 = arith.constant -2 : i32
    %58 = vector.broadcast %c-2_i32 : i32 to vector<2x256xi32>
    %59 = arith.addi %28, %58 : vector<2x256xi32>
    %c0_i32_29 = arith.constant 0 : i32
    %60 = vector.broadcast %c0_i32_29 : i32 to vector<2x256xi32>
    %61 = arith.cmpi sge, %59, %60 : vector<2x256xi32>
    %c256_i32_30 = arith.constant 256 : i32
    %62 = vector.broadcast %c256_i32_30 : i32 to vector<2x256xi32>
    %63 = arith.cmpi slt, %59, %62 : vector<2x256xi32>
    %64 = arith.andi %61, %63 : vector<2x256xi1>
    %cst_31 = arith.constant 0.000000e+00 : f32
    %65 = vector.broadcast %cst_31 : f32 to vector<2x256xf32>
    %66 = arith.select %64, %57, %65 : vector<2x256xi1>, vector<2x256xf32>
    %67 = arith.addf %48, %66 : vector<2x256xf32>
    %c1_i32 = arith.constant 1 : i32
    %68 = tpu.dynamic_rotate %26 by %c1_i32 dim 1 : vector<2x256xf32>, i32 -> vector<2x256xf32>
    %c1_i32_32 = arith.constant 1 : i32
    %69 = tpu.dynamic_rotate %27 by %c1_i32_32 dim 1 : vector<2x256xf32>, i32 -> vector<2x256xf32>
    %c0_33 = arith.constant 0 : index
    %c2 = arith.constant 2 : index
    %70 = memref.load %arg4[%c0_33, %c2] : memref<2x7xf32, #tpu.memory_space<smem>>
    %71 = vector.broadcast %70 : f32 to vector<2x256xf32>
    %72 = arith.mulf %68, %71 : vector<2x256xf32>
    %c1_34 = arith.constant 1 : index
    %c2_35 = arith.constant 2 : index
    %73 = memref.load %arg4[%c1_34, %c2_35] : memref<2x7xf32, #tpu.memory_space<smem>>
    %74 = vector.broadcast %73 : f32 to vector<2x256xf32>
    %75 = arith.mulf %69, %74 : vector<2x256xf32>
    %76 = arith.addf %72, %75 : vector<2x256xf32>
    %c-1_i32 = arith.constant -1 : i32
    %77 = vector.broadcast %c-1_i32 : i32 to vector<2x256xi32>
    %78 = arith.addi %28, %77 : vector<2x256xi32>
    %c0_i32_36 = arith.constant 0 : i32
    %79 = vector.broadcast %c0_i32_36 : i32 to vector<2x256xi32>
    %80 = arith.cmpi sge, %78, %79 : vector<2x256xi32>
    %c256_i32_37 = arith.constant 256 : i32
    %81 = vector.broadcast %c256_i32_37 : i32 to vector<2x256xi32>
    %82 = arith.cmpi slt, %78, %81 : vector<2x256xi32>
    %83 = arith.andi %80, %82 : vector<2x256xi1>
    %cst_38 = arith.constant 0.000000e+00 : f32
    %84 = vector.broadcast %cst_38 : f32 to vector<2x256xf32>
    %85 = arith.select %83, %76, %84 : vector<2x256xi1>, vector<2x256xf32>
    %86 = arith.addf %67, %85 : vector<2x256xf32>
    %c0_39 = arith.constant 0 : index
    %c3 = arith.constant 3 : index
    %87 = memref.load %arg4[%c0_39, %c3] : memref<2x7xf32, #tpu.memory_space<smem>>
    %88 = vector.broadcast %87 : f32 to vector<2x256xf32>
    %89 = arith.mulf %26, %88 : vector<2x256xf32>
    %c1_40 = arith.constant 1 : index
    %c3_41 = arith.constant 3 : index
    %90 = memref.load %arg4[%c1_40, %c3_41] : memref<2x7xf32, #tpu.memory_space<smem>>
    %91 = vector.broadcast %90 : f32 to vector<2x256xf32>
    %92 = arith.mulf %27, %91 : vector<2x256xf32>
    %93 = arith.addf %89, %92 : vector<2x256xf32>
    %c0_i32_42 = arith.constant 0 : i32
    %94 = vector.broadcast %c0_i32_42 : i32 to vector<2x256xi32>
    %95 = arith.addi %28, %94 : vector<2x256xi32>
    %c0_i32_43 = arith.constant 0 : i32
    %96 = vector.broadcast %c0_i32_43 : i32 to vector<2x256xi32>
    %97 = arith.cmpi sge, %95, %96 : vector<2x256xi32>
    %c256_i32_44 = arith.constant 256 : i32
    %98 = vector.broadcast %c256_i32_44 : i32 to vector<2x256xi32>
    %99 = arith.cmpi slt, %95, %98 : vector<2x256xi32>
    %100 = arith.andi %97, %99 : vector<2x256xi1>
    %cst_45 = arith.constant 0.000000e+00 : f32
    %101 = vector.broadcast %cst_45 : f32 to vector<2x256xf32>
    %102 = arith.select %100, %93, %101 : vector<2x256xi1>, vector<2x256xf32>
    %103 = arith.addf %86, %102 : vector<2x256xf32>
    %c255_i32 = arith.constant 255 : i32
    %104 = tpu.dynamic_rotate %26 by %c255_i32 dim 1 : vector<2x256xf32>, i32 -> vector<2x256xf32>
    %c255_i32_46 = arith.constant 255 : i32
    %105 = tpu.dynamic_rotate %27 by %c255_i32_46 dim 1 : vector<2x256xf32>, i32 -> vector<2x256xf32>
    %c0_47 = arith.constant 0 : index
    %c4 = arith.constant 4 : index
    %106 = memref.load %arg4[%c0_47, %c4] : memref<2x7xf32, #tpu.memory_space<smem>>
    %107 = vector.broadcast %106 : f32 to vector<2x256xf32>
    %108 = arith.mulf %104, %107 : vector<2x256xf32>
    %c1_48 = arith.constant 1 : index
    %c4_49 = arith.constant 4 : index
    %109 = memref.load %arg4[%c1_48, %c4_49] : memref<2x7xf32, #tpu.memory_space<smem>>
    %110 = vector.broadcast %109 : f32 to vector<2x256xf32>
    %111 = arith.mulf %105, %110 : vector<2x256xf32>
    %112 = arith.addf %108, %111 : vector<2x256xf32>
    %c1_i32_50 = arith.constant 1 : i32
    %113 = vector.broadcast %c1_i32_50 : i32 to vector<2x256xi32>
    %114 = arith.addi %28, %113 : vector<2x256xi32>
    %c0_i32_51 = arith.constant 0 : i32
    %115 = vector.broadcast %c0_i32_51 : i32 to vector<2x256xi32>
    %116 = arith.cmpi sge, %114, %115 : vector<2x256xi32>
    %c256_i32_52 = arith.constant 256 : i32
    %117 = vector.broadcast %c256_i32_52 : i32 to vector<2x256xi32>
    %118 = arith.cmpi slt, %114, %117 : vector<2x256xi32>
    %119 = arith.andi %116, %118 : vector<2x256xi1>
    %cst_53 = arith.constant 0.000000e+00 : f32
    %120 = vector.broadcast %cst_53 : f32 to vector<2x256xf32>
    %121 = arith.select %119, %112, %120 : vector<2x256xi1>, vector<2x256xf32>
    %122 = arith.addf %103, %121 : vector<2x256xf32>
    %c254_i32 = arith.constant 254 : i32
    %123 = tpu.dynamic_rotate %26 by %c254_i32 dim 1 : vector<2x256xf32>, i32 -> vector<2x256xf32>
    %c254_i32_54 = arith.constant 254 : i32
    %124 = tpu.dynamic_rotate %27 by %c254_i32_54 dim 1 : vector<2x256xf32>, i32 -> vector<2x256xf32>
    %c0_55 = arith.constant 0 : index
    %c5 = arith.constant 5 : index
    %125 = memref.load %arg4[%c0_55, %c5] : memref<2x7xf32, #tpu.memory_space<smem>>
    %126 = vector.broadcast %125 : f32 to vector<2x256xf32>
    %127 = arith.mulf %123, %126 : vector<2x256xf32>
    %c1_56 = arith.constant 1 : index
    %c5_57 = arith.constant 5 : index
    %128 = memref.load %arg4[%c1_56, %c5_57] : memref<2x7xf32, #tpu.memory_space<smem>>
    %129 = vector.broadcast %128 : f32 to vector<2x256xf32>
    %130 = arith.mulf %124, %129 : vector<2x256xf32>
    %131 = arith.addf %127, %130 : vector<2x256xf32>
    %c2_i32_58 = arith.constant 2 : i32
    %132 = vector.broadcast %c2_i32_58 : i32 to vector<2x256xi32>
    %133 = arith.addi %28, %132 : vector<2x256xi32>
    %c0_i32_59 = arith.constant 0 : i32
    %134 = vector.broadcast %c0_i32_59 : i32 to vector<2x256xi32>
    %135 = arith.cmpi sge, %133, %134 : vector<2x256xi32>
    %c256_i32_60 = arith.constant 256 : i32
    %136 = vector.broadcast %c256_i32_60 : i32 to vector<2x256xi32>
    %137 = arith.cmpi slt, %133, %136 : vector<2x256xi32>
    %138 = arith.andi %135, %137 : vector<2x256xi1>
    %cst_61 = arith.constant 0.000000e+00 : f32
    %139 = vector.broadcast %cst_61 : f32 to vector<2x256xf32>
    %140 = arith.select %138, %131, %139 : vector<2x256xi1>, vector<2x256xf32>
    %141 = arith.addf %122, %140 : vector<2x256xf32>
    %c253_i32 = arith.constant 253 : i32
    %142 = tpu.dynamic_rotate %26 by %c253_i32 dim 1 : vector<2x256xf32>, i32 -> vector<2x256xf32>
    %c253_i32_62 = arith.constant 253 : i32
    %143 = tpu.dynamic_rotate %27 by %c253_i32_62 dim 1 : vector<2x256xf32>, i32 -> vector<2x256xf32>
    %c0_63 = arith.constant 0 : index
    %c6 = arith.constant 6 : index
    %144 = memref.load %arg4[%c0_63, %c6] : memref<2x7xf32, #tpu.memory_space<smem>>
    %145 = vector.broadcast %144 : f32 to vector<2x256xf32>
    %146 = arith.mulf %142, %145 : vector<2x256xf32>
    %c1_64 = arith.constant 1 : index
    %c6_65 = arith.constant 6 : index
    %147 = memref.load %arg4[%c1_64, %c6_65] : memref<2x7xf32, #tpu.memory_space<smem>>
    %148 = vector.broadcast %147 : f32 to vector<2x256xf32>
    %149 = arith.mulf %143, %148 : vector<2x256xf32>
    %150 = arith.addf %146, %149 : vector<2x256xf32>
    %c3_i32_66 = arith.constant 3 : i32
    %151 = vector.broadcast %c3_i32_66 : i32 to vector<2x256xi32>
    %152 = arith.addi %28, %151 : vector<2x256xi32>
    %c0_i32_67 = arith.constant 0 : i32
    %153 = vector.broadcast %c0_i32_67 : i32 to vector<2x256xi32>
    %154 = arith.cmpi sge, %152, %153 : vector<2x256xi32>
    %c256_i32_68 = arith.constant 256 : i32
    %155 = vector.broadcast %c256_i32_68 : i32 to vector<2x256xi32>
    %156 = arith.cmpi slt, %152, %155 : vector<2x256xi32>
    %157 = arith.andi %154, %156 : vector<2x256xi1>
    %cst_69 = arith.constant 0.000000e+00 : f32
    %158 = vector.broadcast %cst_69 : f32 to vector<2x256xf32>
    %159 = arith.select %157, %150, %158 : vector<2x256xi1>, vector<2x256xf32>
    %160 = arith.addf %141, %159 : vector<2x256xf32>
    %161 = arith.negf %160 : vector<2x256xf32>
    %162 = math.exp %161 : vector<2x256xf32>
    %cst_70 = arith.constant 1.000000e+00 : f32
    %163 = vector.broadcast %cst_70 : f32 to vector<2x256xf32>
    %164 = arith.addf %163, %162 : vector<2x256xf32>
    %165 = arith.divf %163, %164 : vector<2x256xf32>
    %166 = vector.shape_cast %165 : vector<2x256xf32> to vector<2x1x256xf32>
    %167 = vector.broadcast %166 : vector<2x1x256xf32> to vector<2x16x256xf32>
    %168 = arith.mulf %23, %167 : vector<2x16x256xf32>
    %c0_71 = arith.constant 0 : index
    %c0_72 = arith.constant 0 : index
    %c0_73 = arith.constant 0 : index
    %169 = vector.load %arg5[%c0_71, %c0_72, %c0_73] : memref<2x16x256xf32, #tpu.memory_space<vmem>>, vector<2x16x256xf32>
    tpu.vector_store %arg5[%c0_71, %c0_72, %c0_73], %168 {strides = array<i32>} : memref<2x16x256xf32, #tpu.memory_space<vmem>>, vector<2x16x256xf32>,
    return
  }
  func.func @transform_0(%arg0: i32) -> (i32, i32, i32) {
    %c0_i32 = arith.constant 0 : i32
    %c0_i32_0 = arith.constant 0 : i32
    %c0_i32_1 = arith.constant 0 : i32
    return %arg0, %c0_i32, %c0_i32_0 : i32, i32, i32
  }
  func.func @transform_1(%arg0: i32) -> (i32, i32) {
    %c0_i32 = arith.constant 0 : i32
    %c0_i32_0 = arith.constant 0 : i32
    %c0_i32_1 = arith.constant 0 : i32
    return %c0_i32, %c0_i32_0 : i32, i32
  }
  func.func @transform_2(%arg0: i32) -> (i32, i32) {
    %c0_i32 = arith.constant 0 : i32
    %c0_i32_0 = arith.constant 0 : i32
    %c0_i32_1 = arith.constant 0 : i32
    return %c0_i32, %c0_i32_0 : i32, i32
  }
  func.func @transform_3(%arg0: i32) -> (i32, i32) {
    %c0_i32 = arith.constant 0 : i32
    %c0_i32_0 = arith.constant 0 : i32
    %c0_i32_1 = arith.constant 0 : i32
    return %c0_i32, %c0_i32_0 : i32, i32
  }
  func.func @transform_4(%arg0: i32) -> (i32, i32, i32) {
    %c0_i32 = arith.constant 0 : i32
    %c0_i32_0 = arith.constant 0 : i32
    %c0_i32_1 = arith.constant 0 : i32
    return %arg0, %c0_i32, %c0_i32_0 : i32, i32, i32
  }
}

</mosaic_0001>

<llo_original>
// kernel: tpu_custom_call.1
$region0: #{tpu_custom_call.1}
  #allocation0 [shape = 'u32[]', space=smem, size = 0x4, offset = 0x4, fixed_abs, tag = 'smem constant byte address 0x4 - core index']
  #allocation1 [shape = 'u32[144,128]{1,0:T(1,128)}', space=vmem, size = 0x12000, scoped, tag = 'internal scratch']
  %s0 = inlined_call_operand.hbm [shape: f32[4,16,256], index: 0, kind: input, shape index: {}]
  %s1 = inlined_call_operand.vmem [shape: f32[16,2], index: 1, kind: input, shape index: {}]
  %s2 = inlined_call_operand.vmem [shape: f32[2,16], index: 2, kind: input, shape index: {}]
  %s3 = inlined_call_operand.vmem [shape: f32[2,7], index: 3, kind: input, shape index: {}]
  %s4 = inlined_call_operand.hbm [shape: f32[4,16,256], index: 4, kind: output, shape index: {}]
  %s5 = sld [smem:[#allocation0]]
  $region57: #{tpu_custom_call.1} parent=0
    _
  %s7 = ssub.s32 1, %s5
  %s8 = scalar_select 0, %s7, %s5
  $region1: #{tpu_custom_call.1} parent=0
    #allocation2 [shape = 'u8[65536]{0}', space=vmem, size = 0x10000, scoped, tag = 'input window, operand 0']
    #allocation3 [shape = 's32[2]{0}', space=sflag, size = 0x8, scoped, tag = 'scoped memory for tpu_custom_call.1']
    #allocation4 [shape = 's32[2]{0}', space=sflag, size = 0x8, scoped, tag = 'scoped memory for tpu_custom_call.1']
    #allocation5 [shape = 's32[2]{0}', space=sflag, size = 0x8, scoped, tag = 'scoped memory for tpu_custom_call.1']
    #allocation6 [shape = 'u8[1024]{0}', space=smem, size = 0x400, scoped, tag = 'input window, operand 3, single buffered']
    #allocation7 [shape = 'u8[65536]{0}', space=vmem, size = 0x10000, scoped, tag = 'output window, operand 0']
    %9 = vsyncpa [#allocation3], 0
    %s10 = scalar_lea.sflag [#allocation3], 1
    %11 = vsyncpa %s10, 0
    %12 = vsyncpa [#allocation5], 0
    %13 = vsyncpa [#allocation4], 0
    %s14 = scalar_lea.sflag [#allocation4], 1
    %15 = vsyncpa %s14, 0
    loop: start=0, step=1, limit=4
    $region2: #{tpu_custom_call.1} parent=1 // loop_pre_header
      _
    $region3: #{tpu_custom_call.1} parent=1 // loop_header
      %s17 = sphi 0, %s21
      %p18 = scmp.ge.s32.totalorder %s17, 4
      %s27 = sphi 0, %s29
      %s30 = sphi 0, %s27
      %s31 = sphi 0, %s30
      %s47 = sphi 0, %s31
      %s51 = sphi 0, %s51
      %s53 = sphi 0, %s51
      %s54 = sphi 0, %s53
      %s68 = sphi 0, %s54
      %s72 = sphi 0, %s72
      %s74 = sphi 0, %s72
      %s75 = sphi 0, %s74
      %s89 = sphi 0, %s75
      %s93 = sphi 0, %s93
      %s95 = sphi 0, %s93
      %s96 = sphi 0, %s95
      %s110 = sphi 0, %s96
      %s116 = sphi 0, %s118
      %s119 = sphi 0, %s116
      %s120 = sphi 0, %s119
      %s136 = sphi 0, %s120
    $region4: #{tpu_custom_call.1} parent=1 // loop_header_branch
      %20 = sbr.rel (%p18) target = $region8
    $region5: #{tpu_custom_call.1} parent=1 // loop_body
      %s22 = ssub.s32 %s17, 1
      %s23 = ssub.s32 %s17, 2
      %s24 = sadd.s32 %s17, 1
      %s25 = ssub.s32 %s17, %s24
      %p26 = scmp.eq.s32.totalorder %s25, 0
      %s28 = sadd.s32 %s27, 1
      %s29 = scalar_select %p26, %s27, %s28
      %p32 = pneg %p26
      %p33 = scmp.eq.s32.totalorder %s17, 1
      %p34 = por %p32, %p33
      %p35 = scmp.ne.s32.totalorder %s27, %s30
      %p36 = scmp.eq.s32.totalorder %s17, 0
      %p37 = por %p35, %p36
      %p38 = scmp.ne.s32.totalorder %s27, %s30
      %p39 = scmp.eq.s32.totalorder %s22, 1
      %p40 = por %p38, %p39
      %p41 = scmp.ne.s32.totalorder %s30, %s31
      %p42 = scmp.eq.s32.totalorder %s22, 0
      %p43 = por %p41, %p42
      %p44 = scmp.ne.s32.totalorder %s30, %s31
      %p45 = scmp.eq.s32.totalorder %s23, 1
      %p46 = por %p44, %p45
      %p48 = scmp.ne.s32.totalorder %s31, %s47
      %p49 = scmp.eq.s32.totalorder %s23, 0
      %p50 = por %p48, %p49
      %s52 = sadd.s32 %s51, 1
      %p55 = scmp.eq.s32.totalorder %s17, 1
      %p56 = scmp.ne.s32.totalorder %s51, %s53
      %p57 = scmp.eq.s32.totalorder %s17, 0
      %p58 = por %p56, %p57
      %p59 = scmp.ne.s32.totalorder %s51, %s53
      %p60 = scmp.eq.s32.totalorder %s22, 1
      %p61 = por %p59, %p60
      %p62 = scmp.ne.s32.totalorder %s53, %s54
      %p63 = scmp.eq.s32.totalorder %s22, 0
      %p64 = por %p62, %p63
      %p65 = scmp.ne.s32.totalorder %s53, %s54
      %p66 = scmp.eq.s32.totalorder %s23, 1
      %p67 = por %p65, %p66
      %p69 = scmp.ne.s32.totalorder %s54, %s68
      %p70 = scmp.eq.s32.totalorder %s23, 0
      %p71 = por %p69, %p70
      %s73 = sadd.s32 %s72, 1
      %p76 = scmp.eq.s32.totalorder %s17, 1
      %p77 = scmp.ne.s32.totalorder %s72, %s74
      %p78 = scmp.eq.s32.totalorder %s17, 0
      %p79 = por %p77, %p78
      %p80 = scmp.ne.s32.totalorder %s72, %s74
      %p81 = scmp.eq.s32.totalorder %s22, 1
      %p82 = por %p80, %p81
      %p83 = scmp.ne.s32.totalorder %s74, %s75
      %p84 = scmp.eq.s32.totalorder %s22, 0
      %p85 = por %p83, %p84
      %p86 = scmp.ne.s32.totalorder %s74, %s75
      %p87 = scmp.eq.s32.totalorder %s23, 1
      %p88 = por %p86, %p87
      %p90 = scmp.ne.s32.totalorder %s75, %s89
      %p91 = scmp.eq.s32.totalorder %s23, 0
      %p92 = por %p90, %p91
      %s94 = sadd.s32 %s93, 1
      %p97 = scmp.eq.s32.totalorder %s17, 1
      %p98 = scmp.ne.s32.totalorder %s93, %s95
      %p99 = scmp.eq.s32.totalorder %s17, 0
      %p100 = por %p98, %p99
      %p101 = scmp.ne.s32.totalorder %s93, %s95
      %p102 = scmp.eq.s32.totalorder %s22, 1
      %p103 = por %p101, %p102
      %p104 = scmp.ne.s32.totalorder %s95, %s96
      %p105 = scmp.eq.s32.totalorder %s22, 0
      %p106 = por %p104, %p105
      %p107 = scmp.ne.s32.totalorder %s95, %s96
      %p108 = scmp.eq.s32.totalorder %s23, 1
      %p109 = por %p107, %p108
      %p111 = scmp.ne.s32.totalorder %s96, %s110
      %p112 = scmp.eq.s32.totalorder %s23, 0
      %p113 = por %p111, %p112
      %s114 = ssub.s32 %s17, %s24
      %p115 = scmp.eq.s32.totalorder %s114, 0
      %s117 = sadd.s32 %s116, 1
      %s118 = scalar_select %p115, %s116, %s117
      %p121 = pneg %p115
      %p122 = scmp.eq.s32.totalorder %s17, 1
      %p123 = por %p121, %p122
      %p124 = scmp.ne.s32.totalorder %s116, %s119
      %p125 = scmp.eq.s32.totalorder %s17, 0
      %p126 = por %p124, %p125
      %p127 = scmp.ne.s32.totalorder %s116, %s119
      %p128 = scmp.eq.s32.totalorder %s22, 1
      %p129 = por %p127, %p128
      %p130 = scmp.ne.s32.totalorder %s119, %s120
      %p131 = scmp.eq.s32.totalorder %s22, 0
      %p132 = por %p130, %p131
      %p133 = scmp.ne.s32.totalorder %s119, %s120
      %p134 = scmp.eq.s32.totalorder %s23, 1
      %p135 = por %p133, %p134
      %p137 = scmp.ne.s32.totalorder %s120, %s136
      %p138 = scmp.eq.s32.totalorder %s23, 0
      %p139 = por %p137, %p138
      %p140 = scmp.le.s32.totalorder 1, %s17
      %p141 = scmp.lt.s32.totalorder %s17, 3
      %p142 = pnand %p140, %p141
      %p143 = pneg %p142
      // Predicated region
      $region9: #{tpu_custom_call.1} parent=5 // pred_check
        _
      $region10: #{tpu_custom_call.1} parent=5 // pred_check_branch
        %145 = sbr.rel (%p142) target = $region12
      $region11: #{tpu_custom_call.1} parent=5 // pred_region
        %s146 = ssub.s32 %s17, 1
        // Predicated region
        $region13: #{tpu_custom_call.1} parent=11 // pred_check
          %p147 = pneg %p64
        $region14: #{tpu_custom_call.1} parent=11 // pred_check_branch
          %149 = sbr.rel (%p147) target = $region16
        $region15: #{tpu_custom_call.1} parent=11 // pred_region
          _
        $region16: #{tpu_custom_call.1} parent=11 // pred_fallthru
          _
        // Predicated region
        $region17: #{tpu_custom_call.1} parent=11 // pred_check
          %p150 = pneg %p85
        $region18: #{tpu_custom_call.1} parent=11 // pred_check_branch
          %152 = sbr.rel (%p150) target = $region20
        $region19: #{tpu_custom_call.1} parent=11 // pred_region
          _
        $region20: #{tpu_custom_call.1} parent=11 // pred_fallthru
          _
        // Predicated region
        $region21: #{tpu_custom_call.1} parent=11 // pred_check
          %p153 = pneg %p106
        $region22: #{tpu_custom_call.1} parent=11 // pred_check_branch
          %155 = sbr.rel (%p153) target = $region24
        $region23: #{tpu_custom_call.1} parent=11 // pred_region
          %s157 = ssub.s32 32, 32
          %158 = vsyncadd [#allocation5], %s157
          %s160 = sshll.u32 %s3, 4
          %s161 = int_to_ptr.vmem [resolvable:$true] %s160
          %163 = dma.vmem_to_smem %s161, 32, [#allocation6], [#allocation5]
        $region24: #{tpu_custom_call.1} parent=11 // pred_fallthru
          _
      $region12: #{tpu_custom_call.1} parent=5 // pred_fallthru
        _
      %p164 = scmp.lt.s32.totalorder %s17, 2
      // Predicated region
      $region25: #{tpu_custom_call.1} parent=5 // pred_check
        %p165 = pneg %p164
      $region26: #{tpu_custom_call.1} parent=5 // pred_check_branch
        %167 = sbr.rel (%p165) target = $region28
      $region27: #{tpu_custom_call.1} parent=5 // pred_region
        // Predicated region
        $region29: #{tpu_custom_call.1} parent=27 // pred_check
          %p168 = pneg %p37
        $region30: #{tpu_custom_call.1} parent=27 // pred_check_branch
          %170 = sbr.rel (%p168) target = $region32
        $region31: #{tpu_custom_call.1} parent=27 // pred_region
          %s171 = sand.u32 %s27, 1
          %s172 = scalar_lea.sflag [#allocation3], %s171
          %s173 = sand.u32 %s27, 1
          %s174 = smul.addr %s173, 64
          %s175 = scalar_lea.vmem [#allocation2], %s174
          %s176 = smul.u32 2, %s17
          %s178 = ssub.s32 1024, 1024
          %179 = vsyncadd %s172, %s178
          %s180 = smul.addr %s176, 4
          %s181 = smul.addr %s180, 128
          %s182 = scalar_lea.hbm %s0, %s181
          %s183 = sshll.u32 %s175, 4
          %s184 = int_to_ptr.vmem [resolvable:$true] %s183
          %189 = dma.hbm_to_vmem [thread:$0]  %s182, 1024, %s184, %s172, 256, 256, 16
        $region32: #{tpu_custom_call.1} parent=27 // pred_fallthru
          _
      $region28: #{tpu_custom_call.1} parent=5 // pred_fallthru
        _
      %p190 = scmp.le.s32.totalorder 1, %s17
      %p191 = scmp.lt.s32.totalorder %s17, 3
      %p192 = pnand %p190, %p191
      %p193 = pneg %p192
      // Predicated region
      $region33: #{tpu_custom_call.1} parent=5 // pred_check
        _
      $region34: #{tpu_custom_call.1} parent=5 // pred_check_branch
        %195 = sbr.rel (%p192) target = $region36
      $region35: #{tpu_custom_call.1} parent=5 // pred_region
        %s196 = ssub.s32 %s17, 1
        %s197 = sand.u32 %s30, 1
        %s198 = scalar_lea.sflag [#allocation3], %s197
        %s199 = sand.u32 %s30, 1
        %s200 = smul.addr %s199, 64
        %s201 = scalar_lea.vmem [#allocation2], %s200
        // Predicated region
        $region37: #{tpu_custom_call.1} parent=35 // pred_check
          %p202 = pneg %p43
        $region38: #{tpu_custom_call.1} parent=35 // pred_check_branch
          %204 = sbr.rel (%p202) target = $region40
        $region39: #{tpu_custom_call.1} parent=35 // pred_region
          %205 = dma.done %s198, 1024
        $region40: #{tpu_custom_call.1} parent=35 // pred_fallthru
          _
        // Predicated region
        $region41: #{tpu_custom_call.1} parent=35 // pred_check
          %p206 = pneg %p106
        $region42: #{tpu_custom_call.1} parent=35 // pred_check_branch
          %208 = sbr.rel (%p206) target = $region44
        $region43: #{tpu_custom_call.1} parent=35 // pred_region
          %209 = dma.done [#allocation5], 32
        $region44: #{tpu_custom_call.1} parent=35 // pred_fallthru
          _
        %210 = sfence
        %s211 = sand.u32 %s30, 1
        %s212 = scalar_lea.sflag [#allocation3], %s211
        %s213 = sand.u32 %s30, 1
        %s214 = smul.addr %s213, 64
        %s215 = scalar_lea.vmem [#allocation2], %s214
        %p216 = pneg %p43
        %p217 = pneg %p40
        %p218 = pneg %p64
        %p219 = pneg %p61
        %p220 = pneg %p85
        %p221 = pneg %p82
        %p222 = pneg %p106
        %p223 = pneg %p103
        %p224 = pneg %p132
        %p225 = pneg %p129
        %s226 = sand.u32 %s119, 1
        %s227 = scalar_lea.sflag [#allocation4], %s226
        %s228 = sand.u32 %s119, 1
        %s229 = smul.addr %s228, 64
        %s230 = scalar_lea.vmem [#allocation7], %s229
        %s231 = smul.u32 2, %s22
        %s232 = smul.u32 2, %s22
        %v233 = vld [vmem:[%s201] sm:$0xff]
        %v234 = vld [vmem:[%s201 + $0x8] sm:$0xff]
        %v235 = vld [vmem:[%s201 + $0x10] sm:$0xff]
        %v236 = vld [vmem:[%s201 + $0x18] sm:$0xff]
        %v237 = vld [vmem:[%s201 + $0x20] sm:$0xff]
        %v238 = vld [vmem:[%s201 + $0x28] sm:$0xff]
        %v239 = vld [vmem:[%s201 + $0x30] sm:$0xff]
        %v240 = vld [vmem:[%s201 + $0x38] sm:$0xff]
        %v241 = vadd.f32 %v233, %v234
        %242 = vadd.xlane.f32.xlu0 %v241
        %v243 = vpop.xlane.xlu0 %242
        %v244 = vadd.f32 %v235, %v236
        %245 = vadd.xlane.f32.xlu0 %v244
        %v246 = vpop.xlane.xlu0 %245
        %v247 = vadd.f32 %v237, %v238
        %248 = vadd.xlane.f32.xlu0 %v247
        %v249 = vpop.xlane.xlu0 %248
        %v250 = vadd.f32 %v239, %v240
        %251 = vadd.xlane.f32.xlu0 %v250
        %v252 = vpop.xlane.xlu0 %251
        %v253 = vrcp.pop 256.0
        %v254 = vmul.f32 %v243, %v253
        %v255 = vmul.f32 %v246, %v253
        %v256 = vmul.f32 %v249, %v253
        %v257 = vmul.f32 %v252, %v253
        %v258 = vmax.f32 %v233, %v234
        %259 = vmax.xlane.f32.xlu0 %v258
        %v260 = vpop.xlane.xlu0 %259
        %v261 = vmax.f32 %v235, %v236
        %262 = vmax.xlane.f32.xlu0 %v261
        %v263 = vpop.xlane.xlu0 %262
        %v264 = vmax.f32 %v237, %v238
        %265 = vmax.xlane.f32.xlu0 %v264
        %v266 = vpop.xlane.xlu0 %265
        %v267 = vmax.f32 %v239, %v240
        %268 = vmax.xlane.f32.xlu0 %v267
        %v269 = vpop.xlane.xlu0 %268
        %v270 = vld [vmem:[%s1] sm:$0xff]
        %v271 = vld [vmem:[%s1 + $0x8] sm:$0xff]
        %v272 = vld [vmem:[%s2] sm:$0x3]
        %v277 = vlaneseq
        %v278 = vand.u32 %v277, 127
        %v279 = vlaneseq
        %v280 = vshrl.u32 %v279, 7
        %v281 = vsub.s32 %v278, %v280
        %v282 = vrot.slane %v254, %v281
        %v283 = vadd.s32 %v278, 4294967288
        %v284 = vlaneseq
        %v285 = vshrl.u32 %v284, 7
        %v286 = vsub.s32 %v283, %v285
        %v287 = vrot.slane %v255, %v286
        %vm288 = vcmask 130112
        %v289 = vsel %vm288, %v287, %v282
        %v290 = vlaneseq
        %v291 = vshrl.u32 %v290, 7
        %v292 = vsub.s32 %v278, %v291
        %v293 = vrot.slane %v256, %v292
        %v294 = vlaneseq
        %v295 = vshrl.u32 %v294, 7
        %v296 = vsub.s32 %v283, %v295
        %v297 = vrot.slane %v257, %v296
        %v298 = vsel %vm288, %v297, %v293
        %vm299 = vcmask 1041409
        %v300 = vsel %vm299, %v298, %v289
        %vm301 = vcmask 130048
        %v302 = vsel %vm301, %v300, 0
        %304 = vmatprep.subr.mxu0 0.0
        %305 = vmatpush1.msra.mxu0 %v270
        %306 = vmatprep.subr.mxu0 0.0
        %307 = vmatpush1.msra.mxu0 %v271
        %308 = vmatprep.subr.mxu0 0.0
        %309 = vmatpush1.msra.mxu0 0.0
        %310 = vmatprep.subr.mxu0 0.0
        %311 = vmatpush1.msra.mxu0 0.0
        %312 = vmatprep.subr.mxu0 0.0
        %313 = vmatpush1.msra.mxu0 0.0
        %314 = vmatprep.subr.mxu0 0.0
        %315 = vmatpush1.msra.mxu0 0.0
        %316 = vmatprep.subr.mxu0 0.0
        %317 = vmatpush1.msra.mxu0 0.0
        %318 = vmatprep.subr.mxu0 0.0
        %319 = vmatpush1.msra.mxu0 0.0
        %320 = vmatprep.subr.mxu0 0.0
        %321 = vmatpush1.msra.mxu0 0.0
        %322 = vmatprep.subr.mxu0 0.0
        %323 = vmatpush1.msra.mxu0 0.0
        %324 = vmatprep.subr.mxu0 0.0
        %325 = vmatpush1.msra.mxu0 0.0
        %326 = vmatprep.subr.mxu0 0.0
        %327 = vmatpush1.msra.mxu0 0.0
        %328 = vmatprep.subr.mxu0 0.0
        %329 = vmatpush1.msra.mxu0 0.0
        %330 = vmatprep.subr.mxu0 0.0
        %331 = vmatpush1.msra.mxu0 0.0
        %332 = vmatprep.subr.mxu0 0.0
        %333 = vmatpush1.msra.mxu0 0.0
        %334 = vmatprep.subr.mxu0 0.0
        %335 = vmatpush1.msra.mxu0 0.0
        %336 = vmatprep.subr.mxu0 0.0
        %337 = vmatpush1.msra.mxu0 0.0
        %338 = vmatprep.subr.mxu0 0.0
        %339 = vmatpush1.msra.mxu0 0.0
        %340 = vmatprep.subr.mxu0 0.0
        %341 = vmatpush1.msra.mxu0 0.0
        %342 = vmatprep.subr.mxu0 0.0
        %343 = vmatpush1.msra.mxu0 0.0
        %344 = vmatprep.subr.mxu0 0.0
        %345 = vmatpush1.msra.mxu0 0.0
        %346 = vmatprep.subr.mxu0 0.0
        %347 = vmatpush1.msra.mxu0 0.0
        %348 = vmatprep.subr.mxu0 0.0
        %349 = vmatpush1.msra.mxu0 0.0
        %350 = vmatprep.subr.mxu0 0.0
        %351 = vmatpush1.msra.mxu0 0.0
        %352 = vmatprep.subr.mxu0 0.0
        %353 = vmatpush1.msra.mxu0 0.0
        %354 = vmatprep.subr.mxu0 0.0
        %355 = vmatpush1.msra.mxu0 0.0
        %356 = vmatprep.subr.mxu0 0.0
        %357 = vmatpush1.msra.mxu0 0.0
        %358 = vmatprep.subr.mxu0 0.0
        %359 = vmatpush1.msra.mxu0 0.0
        %360 = vmatprep.subr.mxu0 0.0
        %361 = vmatpush1.msra.mxu0 0.0
        %362 = vmatprep.subr.mxu0 0.0
        %363 = vmatpush1.msra.mxu0 0.0
        %364 = vmatprep.subr.mxu0 0.0
        %365 = vmatpush1.msra.mxu0 0.0
        %366 = vmatprep.subr.mxu0 0.0
        %367 = vmatpush1.msra.mxu0 0.0
        %368 = vmatprep.mubr.f32.mxu0 0.0
        %369 = vmatmul.mubr.f32.gmra.mrb[0].mxu0 %v302
        %v370 = vpop.f32.mrb[0].mxu0
        %v371 = vadd.f32 0.0, %v370
        %v372 = vpop.f32.mrb[0].mxu0
        %373 = vdwg.mxu0
        %v374 = vmax.f32 %v371, 0.0
        %v379 = vlaneseq
        %v380 = vshrl.u32 %v379, 7
        %v381 = vsub.s32 %v278, %v380
        %v382 = vrot.slane %v260, %v381
        %v383 = vlaneseq
        %v384 = vshrl.u32 %v383, 7
        %v385 = vsub.s32 %v283, %v384
        %v386 = vrot.slane %v263, %v385
        %v387 = vsel %vm288, %v386, %v382
        %v388 = vlaneseq
        %v389 = vshrl.u32 %v388, 7
        %v390 = vsub.s32 %v278, %v389
        %v391 = vrot.slane %v266, %v390
        %v392 = vlaneseq
        %v393 = vshrl.u32 %v392, 7
        %v394 = vsub.s32 %v283, %v393
        %v395 = vrot.slane %v269, %v394
        %v396 = vsel %vm288, %v395, %v391
        %v397 = vsel %vm299, %v396, %v387
        %v398 = vsel %vm301, %v397, 0
        %400 = vmatprep.subr.mxu0 0.0
        %401 = vmatpush1.msra.mxu0 %v270
        %402 = vmatprep.subr.mxu0 0.0
        %403 = vmatpush1.msra.mxu0 %v271
        %404 = vmatprep.subr.mxu0 0.0
        %405 = vmatpush1.msra.mxu0 0.0
        %406 = vmatprep.subr.mxu0 0.0
        %407 = vmatpush1.msra.mxu0 0.0
        %408 = vmatprep.subr.mxu0 0.0
        %409 = vmatpush1.msra.mxu0 0.0
        %410 = vmatprep.subr.mxu0 0.0
        %411 = vmatpush1.msra.mxu0 0.0
        %412 = vmatprep.subr.mxu0 0.0
        %413 = vmatpush1.msra.mxu0 0.0
        %414 = vmatprep.subr.mxu0 0.0
        %415 = vmatpush1.msra.mxu0 0.0
        %416 = vmatprep.subr.mxu0 0.0
        %417 = vmatpush1.msra.mxu0 0.0
        %418 = vmatprep.subr.mxu0 0.0
        %419 = vmatpush1.msra.mxu0 0.0
        %420 = vmatprep.subr.mxu0 0.0
        %421 = vmatpush1.msra.mxu0 0.0
        %422 = vmatprep.subr.mxu0 0.0
        %423 = vmatpush1.msra.mxu0 0.0
        %424 = vmatprep.subr.mxu0 0.0
        %425 = vmatpush1.msra.mxu0 0.0
        %426 = vmatprep.subr.mxu0 0.0
        %427 = vmatpush1.msra.mxu0 0.0
        %428 = vmatprep.subr.mxu0 0.0
        %429 = vmatpush1.msra.mxu0 0.0
        %430 = vmatprep.subr.mxu0 0.0
        %431 = vmatpush1.msra.mxu0 0.0
        %432 = vmatprep.subr.mxu0 0.0
        %433 = vmatpush1.msra.mxu0 0.0
        %434 = vmatprep.subr.mxu0 0.0
        %435 = vmatpush1.msra.mxu0 0.0
        %436 = vmatprep.subr.mxu0 0.0
        %437 = vmatpush1.msra.mxu0 0.0
        %438 = vmatprep.subr.mxu0 0.0
        %439 = vmatpush1.msra.mxu0 0.0
        %440 = vmatprep.subr.mxu0 0.0
        %441 = vmatpush1.msra.mxu0 0.0
        %442 = vmatprep.subr.mxu0 0.0
        %443 = vmatpush1.msra.mxu0 0.0
        %444 = vmatprep.subr.mxu0 0.0
        %445 = vmatpush1.msra.mxu0 0.0
        %446 = vmatprep.subr.mxu0 0.0
        %447 = vmatpush1.msra.mxu0 0.0
        %448 = vmatprep.subr.mxu0 0.0
        %449 = vmatpush1.msra.mxu0 0.0
        %450 = vmatprep.subr.mxu0 0.0
        %451 = vmatpush1.msra.mxu0 0.0
        %452 = vmatprep.subr.mxu0 0.0
        %453 = vmatpush1.msra.mxu0 0.0
        %454 = vmatprep.subr.mxu0 0.0
        %455 = vmatpush1.msra.mxu0 0.0
        %456 = vmatprep.subr.mxu0 0.0
        %457 = vmatpush1.msra.mxu0 0.0
        %458 = vmatprep.subr.mxu0 0.0
        %459 = vmatpush1.msra.mxu0 0.0
        %460 = vmatprep.subr.mxu0 0.0
        %461 = vmatpush1.msra.mxu0 0.0
        %462 = vmatprep.subr.mxu0 0.0
        %463 = vmatpush1.msra.mxu0 0.0
        %464 = vmatprep.mubr.f32.mxu0 0.0
        %465 = vmatmul.mubr.f32.gmra.mrb[0].mxu0 %v398
        %v466 = vpop.f32.mrb[0].mxu0
        %v467 = vadd.f32 0.0, %v466
        %v468 = vpop.f32.mrb[0].mxu0
        %469 = vdwg.mxu0
        %v470 = vmax.f32 %v467, 0.0
        %vm471 = vcmask 15360
        %v473 = vsel %vm471, %v470, 0
        %vm475 = vcmask 1041408
        %v477 = vsel %vm475, %v272, 0
        %479 = vmatprep.subr.mxu0 0.0
        %480 = vmatpush1.msra.mxu0 %v477
        %481 = vmatprep.subr.mxu0 0.0
        %482 = vmatpush1.msra.mxu0 0.0
        %483 = vmatprep.subr.mxu0 0.0
        %484 = vmatpush1.msra.mxu0 0.0
        %485 = vmatprep.subr.mxu0 0.0
        %486 = vmatpush1.msra.mxu0 0.0
        %487 = vmatprep.subr.mxu0 0.0
        %488 = vmatpush1.msra.mxu0 0.0
        %489 = vmatprep.subr.mxu0 0.0
        %490 = vmatpush1.msra.mxu0 0.0
        %491 = vmatprep.subr.mxu0 0.0
        %492 = vmatpush1.msra.mxu0 0.0
        %493 = vmatprep.subr.mxu0 0.0
        %494 = vmatpush1.msra.mxu0 0.0
        %495 = vmatprep.subr.mxu0 0.0
        %496 = vmatpush1.msra.mxu0 0.0
        %497 = vmatprep.subr.mxu0 0.0
        %498 = vmatpush1.msra.mxu0 0.0
        %499 = vmatprep.subr.mxu0 0.0
        %500 = vmatpush1.msra.mxu0 0.0
        %501 = vmatprep.subr.mxu0 0.0
        %502 = vmatpush1.msra.mxu0 0.0
        %503 = vmatprep.subr.mxu0 0.0
        %504 = vmatpush1.msra.mxu0 0.0
        %505 = vmatprep.subr.mxu0 0.0
        %506 = vmatpush1.msra.mxu0 0.0
        %507 = vmatprep.subr.mxu0 0.0
        %508 = vmatpush1.msra.mxu0 0.0
        %509 = vmatprep.subr.mxu0 0.0
        %510 = vmatpush1.msra.mxu0 0.0
        %511 = vmatprep.subr.mxu0 0.0
        %512 = vmatpush1.msra.mxu0 0.0
        %513 = vmatprep.subr.mxu0 0.0
        %514 = vmatpush1.msra.mxu0 0.0
        %515 = vmatprep.subr.mxu0 0.0
        %516 = vmatpush1.msra.mxu0 0.0
        %517 = vmatprep.subr.mxu0 0.0
        %518 = vmatpush1.msra.mxu0 0.0
        %519 = vmatprep.subr.mxu0 0.0
        %520 = vmatpush1.msra.mxu0 0.0
        %521 = vmatprep.subr.mxu0 0.0
        %522 = vmatpush1.msra.mxu0 0.0
        %523 = vmatprep.subr.mxu0 0.0
        %524 = vmatpush1.msra.mxu0 0.0
        %525 = vmatprep.subr.mxu0 0.0
        %526 = vmatpush1.msra.mxu0 0.0
        %527 = vmatprep.subr.mxu0 0.0
        %528 = vmatpush1.msra.mxu0 0.0
        %529 = vmatprep.subr.mxu0 0.0
        %530 = vmatpush1.msra.mxu0 0.0
        %531 = vmatprep.subr.mxu0 0.0
        %532 = vmatpush1.msra.mxu0 0.0
        %533 = vmatprep.subr.mxu0 0.0
        %534 = vmatpush1.msra.mxu0 0.0
        %535 = vmatprep.subr.mxu0 0.0
        %536 = vmatpush1.msra.mxu0 0.0
        %537 = vmatprep.subr.mxu0 0.0
        %538 = vmatpush1.msra.mxu0 0.0
        %539 = vmatprep.subr.mxu0 0.0
        %540 = vmatpush1.msra.mxu0 0.0
        %541 = vmatprep.subr.mxu0 0.0
        %542 = vmatpush1.msra.mxu0 0.0
        %543 = vmatprep.mubr.f32.mxu0 0.0
        %544 = vmatmul.mubr.f32.gmra.mrb[0].mxu0 %v473
        %v545 = vpop.f32.mrb[0].mxu0
        %v546 = vadd.f32 0.0, %v545
        %v547 = vpop.f32.mrb[0].mxu0
        %548 = vdwg.mxu0
        %v550 = vsel %vm471, %v374, 0
        %552 = vmatprep.subr.mxu0 0.0
        %553 = vmatpush1.msra.mxu0 %v477
        %554 = vmatprep.subr.mxu0 0.0
        %555 = vmatpush1.msra.mxu0 0.0
        %556 = vmatprep.subr.mxu0 0.0
        %557 = vmatpush1.msra.mxu0 0.0
        %558 = vmatprep.subr.mxu0 0.0
        %559 = vmatpush1.msra.mxu0 0.0
        %560 = vmatprep.subr.mxu0 0.0
        %561 = vmatpush1.msra.mxu0 0.0
        %562 = vmatprep.subr.mxu0 0.0
        %563 = vmatpush1.msra.mxu0 0.0
        %564 = vmatprep.subr.mxu0 0.0
        %565 = vmatpush1.msra.mxu0 0.0
        %566 = vmatprep.subr.mxu0 0.0
        %567 = vmatpush1.msra.mxu0 0.0
        %568 = vmatprep.subr.mxu0 0.0
        %569 = vmatpush1.msra.mxu0 0.0
        %570 = vmatprep.subr.mxu0 0.0
        %571 = vmatpush1.msra.mxu0 0.0
        %572 = vmatprep.subr.mxu0 0.0
        %573 = vmatpush1.msra.mxu0 0.0
        %574 = vmatprep.subr.mxu0 0.0
        %575 = vmatpush1.msra.mxu0 0.0
        %576 = vmatprep.subr.mxu0 0.0
        %577 = vmatpush1.msra.mxu0 0.0
        %578 = vmatprep.subr.mxu0 0.0
        %579 = vmatpush1.msra.mxu0 0.0
        %580 = vmatprep.subr.mxu0 0.0
        %581 = vmatpush1.msra.mxu0 0.0
        %582 = vmatprep.subr.mxu0 0.0
        %583 = vmatpush1.msra.mxu0 0.0
        %584 = vmatprep.subr.mxu0 0.0
        %585 = vmatpush1.msra.mxu0 0.0
        %586 = vmatprep.subr.mxu0 0.0
        %587 = vmatpush1.msra.mxu0 0.0
        %588 = vmatprep.subr.mxu0 0.0
        %589 = vmatpush1.msra.mxu0 0.0
        %590 = vmatprep.subr.mxu0 0.0
        %591 = vmatpush1.msra.mxu0 0.0
        %592 = vmatprep.subr.mxu0 0.0
        %593 = vmatpush1.msra.mxu0 0.0
        %594 = vmatprep.subr.mxu0 0.0
        %595 = vmatpush1.msra.mxu0 0.0
        %596 = vmatprep.subr.mxu0 0.0
        %597 = vmatpush1.msra.mxu0 0.0
        %598 = vmatprep.subr.mxu0 0.0
        %599 = vmatpush1.msra.mxu0 0.0
        %600 = vmatprep.subr.mxu0 0.0
        %601 = vmatpush1.msra.mxu0 0.0
        %602 = vmatprep.subr.mxu0 0.0
        %603 = vmatpush1.msra.mxu0 0.0
        %604 = vmatprep.subr.mxu0 0.0
        %605 = vmatpush1.msra.mxu0 0.0
        %606 = vmatprep.subr.mxu0 0.0
        %607 = vmatpush1.msra.mxu0 0.0
        %608 = vmatprep.subr.mxu0 0.0
        %609 = vmatpush1.msra.mxu0 0.0
        %610 = vmatprep.subr.mxu0 0.0
        %611 = vmatpush1.msra.mxu0 0.0
        %612 = vmatprep.subr.mxu0 0.0
        %613 = vmatpush1.msra.mxu0 0.0
        %614 = vmatprep.subr.mxu0 0.0
        %615 = vmatpush1.msra.mxu0 0.0
        %616 = vmatprep.mubr.f32.mxu0 0.0
        %617 = vmatmul.mubr.f32.gmra.mrb[0].mxu0 %v550
        %v618 = vpop.f32.mrb[0].mxu0
        %v619 = vadd.f32 %v546, %v618
        %v620 = vpop.f32.mrb[0].mxu0
        %621 = vdwg.mxu0
        %v622 = vxor.u32 %v619, 2147483648
        %v623 = vmul.f32 %v622, 1.442695
        %v624 = vpow.pop %v623
        %v625 = vadd.f32 %v624, 1.0
        %v626 = vrcp.pop %v625
        %v627 = vmul.f32 1.0, %v626
        %v628 = vlaneseq
        %v629 = vshrl.u32 %v628, 7
        %v630 = vsub.s32 0, %v629
        %v631 = vrot.slane %v627, %v630
        %633 = vbcast.lane.b32.xlu0 %v631, 256
        %v634 = vpop.permute.xlu0 %633
        %s636 = sor.u32 256, 8
        %637 = vbcast.lane.b32.xlu0 %v631, %s636
        %v638 = vpop.permute.xlu0 %637
        %v639 = vlaneseq
        %v640 = vshrl.u32 %v639, 7
        %v641 = vsub.s32 1, %v640
        %v642 = vrot.slane %v627, %v641
        %644 = vbcast.lane.b32.xlu0 %v642, 256
        %v645 = vpop.permute.xlu0 %644
        %s647 = sor.u32 256, 8
        %648 = vbcast.lane.b32.xlu0 %v642, %s647
        %v649 = vpop.permute.xlu0 %648
        %v650 = vmul.f32 %v233, %v634
        %v651 = vmul.f32 %v234, %v634
        %v652 = vmul.f32 %v235, %v638
        %v653 = vmul.f32 %v236, %v638
        %v654 = vmul.f32 %v237, %v645
        %v655 = vmul.f32 %v238, %v645
        %v656 = vmul.f32 %v239, %v649
        %v657 = vmul.f32 %v240, %v649
        %v658 = vadd.f32 %v650, %v652
        %v659 = vrot.slane %v658, 4
        %v660 = vadd.f32 %v658, %v659
        %v661 = vrot.slane %v660, 2
        %v662 = vadd.f32 %v660, %v661
        %v663 = vrot.slane %v662, 1
        %v664 = vadd.f32 %v662, %v663
        %v665 = vadd.f32 %v651, %v653
        %v666 = vrot.slane %v665, 4
        %v667 = vadd.f32 %v665, %v666
        %v668 = vrot.slane %v667, 2
        %v669 = vadd.f32 %v667, %v668
        %v670 = vrot.slane %v669, 1
        %v671 = vadd.f32 %v669, %v670
        %v672 = vadd.f32 %v654, %v656
        %v673 = vrot.slane %v672, 4
        %v674 = vadd.f32 %v672, %v673
        %v675 = vrot.slane %v674, 2
        %v676 = vadd.f32 %v674, %v675
        %v677 = vrot.slane %v676, 1
        %v678 = vadd.f32 %v676, %v677
        %v679 = vadd.f32 %v655, %v657
        %v680 = vrot.slane %v679, 4
        %v681 = vadd.f32 %v679, %v680
        %v682 = vrot.slane %v681, 2
        %v683 = vadd.f32 %v681, %v682
        %v684 = vrot.slane %v683, 1
        %v685 = vadd.f32 %v683, %v684
        %v686 = vrcp.pop 16.0
        %v687 = vmul.f32 %v664, %v686
        %v688 = vmul.f32 %v671, %v686
        %v689 = vmul.f32 %v678, %v686
        %v690 = vmul.f32 %v685, %v686
        %v691 = vmax.f32 %v650, %v652
        %v692 = vrot.slane %v691, 4
        %v693 = vmax.f32 %v691, %v692
        %v694 = vrot.slane %v693, 2
        %v695 = vmax.f32 %v693, %v694
        %v696 = vrot.slane %v695, 1
        %v697 = vmax.f32 %v695, %v696
        %v698 = vmax.f32 %v651, %v653
        %v699 = vrot.slane %v698, 4
        %v700 = vmax.f32 %v698, %v699
        %v701 = vrot.slane %v700, 2
        %v702 = vmax.f32 %v700, %v701
        %v703 = vrot.slane %v702, 1
        %v704 = vmax.f32 %v702, %v703
        %v705 = vmax.f32 %v654, %v656
        %v706 = vrot.slane %v705, 4
        %v707 = vmax.f32 %v705, %v706
        %v708 = vrot.slane %v707, 2
        %v709 = vmax.f32 %v707, %v708
        %v710 = vrot.slane %v709, 1
        %v711 = vmax.f32 %v709, %v710
        %v712 = vmax.f32 %v655, %v657
        %v713 = vrot.slane %v712, 4
        %v714 = vmax.f32 %v712, %v713
        %v715 = vrot.slane %v714, 2
        %v716 = vmax.f32 %v714, %v715
        %v717 = vrot.slane %v716, 1
        %v718 = vmax.f32 %v716, %v717
        %v719 = vadd.s32 %v278, 128
        %v724 = vsel %vm299, %v689, %v687
        %v725 = vsel %vm299, %v690, %v688
        %728 = vrot.lane.b32.xlu0 %v724, 3
        %v729 = vpop.permute.xlu0 %728
        %730 = vrot.lane.b32.xlu0 %v725, 3
        %v731 = vpop.permute.xlu0 %730
        %vm732 = vcmp.lt.s32.totalorder %v278, 3
        %v733 = vsel %vm732, %v729, %v731
        %v734 = vsel %vm732, %v731, %v729
        %v739 = vsel %vm299, %v711, %v697
        %v740 = vsel %vm299, %v718, %v704
        %743 = vrot.lane.b32.xlu0 %v739, 3
        %v744 = vpop.permute.xlu0 %743
        %745 = vrot.lane.b32.xlu0 %v740, 3
        %v746 = vpop.permute.xlu0 %745
        %v747 = vsel %vm732, %v744, %v746
        %v748 = vsel %vm732, %v746, %v744
        %s749 = sld [smem:[#allocation6]]
        %v750 = vstv %s749
        %v751 = vmul.f32 %v734, %v750
        %v752 = vmul.f32 %v733, %v750
        %s753 = sld [smem:[#allocation6 + $0x80]]
        %v754 = vstv %s753
        %v755 = vmul.f32 %v748, %v754
        %v756 = vmul.f32 %v747, %v754
        %v757 = vadd.f32 %v751, %v755
        %v758 = vadd.f32 %v752, %v756
        %v759 = vadd.s32 %v278, 4294967293
        %v760 = vadd.s32 %v719, 4294967293
        %vm761 = vcmp.ge.s32.totalorder %v759, 0
        %vm762 = vcmp.ge.s32.totalorder %v760, 0
        %vm763 = vcmp.lt.s32.totalorder %v759, 256
        %vm764 = vcmp.lt.s32.totalorder %v760, 256
        %vm765 = vmand %vm761, %vm763
        %vm766 = vmand %vm762, %vm764
        %v767 = vsel %vm765, %v757, 0.0
        %v768 = vsel %vm766, %v758, 0.0
        %v769 = vadd.f32 %v767, 0.0
        %v770 = vadd.f32 %v768, 0.0
        %771 = vrot.lane.b32.xlu0 %v724, 2
        %v772 = vpop.permute.xlu0 %771
        %773 = vrot.lane.b32.xlu0 %v725, 2
        %v774 = vpop.permute.xlu0 %773
        %vm775 = vcmp.lt.s32.totalorder %v278, 2
        %v776 = vsel %vm775, %v772, %v774
        %v777 = vsel %vm775, %v774, %v772
        %778 = vrot.lane.b32.xlu0 %v739, 2
        %v779 = vpop.permute.xlu0 %778
        %780 = vrot.lane.b32.xlu0 %v740, 2
        %v781 = vpop.permute.xlu0 %780
        %v782 = vsel %vm775, %v779, %v781
        %v783 = vsel %vm775, %v781, %v779
        %s784 = sld [smem:[#allocation6 + $0x1]]
        %v785 = vstv %s784
        %v786 = vmul.f32 %v777, %v785
        %v787 = vmul.f32 %v776, %v785
        %s788 = sld [smem:[#allocation6 + $0x81]]
        %v789 = vstv %s788
        %v790 = vmul.f32 %v783, %v789
        %v791 = vmul.f32 %v782, %v789
        %v792 = vadd.f32 %v786, %v790
        %v793 = vadd.f32 %v787, %v791
        %v794 = vadd.s32 %v278, 4294967294
        %v795 = vadd.s32 %v719, 4294967294
        %vm796 = vcmp.ge.s32.totalorder %v794, 0
        %vm797 = vcmp.ge.s32.totalorder %v795, 0
        %vm798 = vcmp.lt.s32.totalorder %v794, 256
        %vm799 = vcmp.lt.s32.totalorder %v795, 256
        %vm800 = vmand %vm796, %vm798
        %vm801 = vmand %vm797, %vm799
        %v802 = vsel %vm800, %v792, 0.0
        %v803 = vsel %vm801, %v793, 0.0
        %v804 = vadd.f32 %v769, %v802
        %v805 = vadd.f32 %v770, %v803
        %806 = vrot.lane.b32.xlu0 %v724, 1
        %v807 = vpop.permute.xlu0 %806
        %808 = vrot.lane.b32.xlu0 %v725, 1
        %v809 = vpop.permute.xlu0 %808
        %vm810 = vcmp.lt.s32.totalorder %v278, 1
        %v811 = vsel %vm810, %v807, %v809
        %v812 = vsel %vm810, %v809, %v807
        %813 = vrot.lane.b32.xlu0 %v739, 1
        %v814 = vpop.permute.xlu0 %813
        %815 = vrot.lane.b32.xlu0 %v740, 1
        %v816 = vpop.permute.xlu0 %815
        %v817 = vsel %vm810, %v814, %v816
        %v818 = vsel %vm810, %v816, %v814
        %s819 = sld [smem:[#allocation6 + $0x2]]
        %v820 = vstv %s819
        %v821 = vmul.f32 %v812, %v820
        %v822 = vmul.f32 %v811, %v820
        %s823 = sld [smem:[#allocation6 + $0x82]]
        %v824 = vstv %s823
        %v825 = vmul.f32 %v818, %v824
        %v826 = vmul.f32 %v817, %v824
        %v827 = vadd.f32 %v821, %v825
        %v828 = vadd.f32 %v822, %v826
        %v829 = vadd.s32 %v278, 4294967295
        %v830 = vadd.s32 %v719, 4294967295
        %vm831 = vcmp.ge.s32.totalorder %v829, 0
        %vm832 = vcmp.ge.s32.totalorder %v830, 0
        %vm833 = vcmp.lt.s32.totalorder %v829, 256
        %vm834 = vcmp.lt.s32.totalorder %v830, 256
        %vm835 = vmand %vm831, %vm833
        %vm836 = vmand %vm832, %vm834
        %v837 = vsel %vm835, %v827, 0.0
        %v838 = vsel %vm836, %v828, 0.0
        %v839 = vadd.f32 %v804, %v837
        %v840 = vadd.f32 %v805, %v838
        %s841 = sld [smem:[#allocation6 + $0x3]]
        %v842 = vstv %s841
        %v843 = vmul.f32 %v687, %v842
        %v844 = vmul.f32 %v688, %v842
        %v845 = vmul.f32 %v689, %v842
        %v846 = vmul.f32 %v690, %v842
        %s847 = sld [smem:[#allocation6 + $0x83]]
        %v848 = vstv %s847
        %v849 = vmul.f32 %v697, %v848
        %v850 = vmul.f32 %v704, %v848
        %v851 = vmul.f32 %v711, %v848
        %v852 = vmul.f32 %v718, %v848
        %v853 = vadd.f32 %v843, %v849
        %v854 = vadd.f32 %v844, %v850
        %v855 = vadd.f32 %v845, %v851
        %v856 = vadd.f32 %v846, %v852
        %vm857 = vcmp.ge.s32.totalorder %v278, 0
        %vm858 = vcmp.ge.s32.totalorder %v719, 0
        %vm859 = vcmp.lt.s32.totalorder %v278, 256
        %vm860 = vcmp.lt.s32.totalorder %v719, 256
        %vm861 = vmand %vm857, %vm859
        %vm862 = vmand %vm858, %vm860
        %v867 = vsel %vm299, %v855, %v853
        %v868 = vsel %vm299, %v856, %v854
        %v871 = vsel %vm861, %v867, 0.0
        %v872 = vsel %vm862, %v868, 0.0
        %v873 = vadd.f32 %v839, %v871
        %v874 = vadd.f32 %v840, %v872
        %875 = vrot.lane.b32.xlu0 %v724, 127
        %v876 = vpop.permute.xlu0 %875
        %877 = vrot.lane.b32.xlu0 %v725, 127
        %v878 = vpop.permute.xlu0 %877
        %vm879 = vcmp.lt.s32.totalorder %v278, 127
        %v880 = vsel %vm879, %v876, %v878
        %v881 = vsel %vm879, %v878, %v876
        %882 = vrot.lane.b32.xlu0 %v739, 127
        %v883 = vpop.permute.xlu0 %882
        %884 = vrot.lane.b32.xlu0 %v740, 127
        %v885 = vpop.permute.xlu0 %884
        %v886 = vsel %vm879, %v883, %v885
        %v887 = vsel %vm879, %v885, %v883
        %s888 = sld [smem:[#allocation6 + $0x4]]
        %v889 = vstv %s888
        %v890 = vmul.f32 %v880, %v889
        %v891 = vmul.f32 %v881, %v889
        %s892 = sld [smem:[#allocation6 + $0x84]]
        %v893 = vstv %s892
        %v894 = vmul.f32 %v886, %v893
        %v895 = vmul.f32 %v887, %v893
        %v896 = vadd.f32 %v890, %v894
        %v897 = vadd.f32 %v891, %v895
        %v898 = vadd.s32 %v278, 1
        %v899 = vadd.s32 %v719, 1
        %vm900 = vcmp.ge.s32.totalorder %v898, 0
        %vm901 = vcmp.ge.s32.totalorder %v899, 0
        %vm902 = vcmp.lt.s32.totalorder %v898, 256
        %vm903 = vcmp.lt.s32.totalorder %v899, 256
        %vm904 = vmand %vm900, %vm902
        %vm905 = vmand %vm901, %vm903
        %v906 = vsel %vm904, %v896, 0.0
        %v907 = vsel %vm905, %v897, 0.0
        %v908 = vadd.f32 %v873, %v906
        %v909 = vadd.f32 %v874, %v907
        %910 = vrot.lane.b32.xlu0 %v724, 126
        %v911 = vpop.permute.xlu0 %910
        %912 = vrot.lane.b32.xlu0 %v725, 126
        %v913 = vpop.permute.xlu0 %912
        %vm914 = vcmp.lt.s32.totalorder %v278, 126
        %v915 = vsel %vm914, %v911, %v913
        %v916 = vsel %vm914, %v913, %v911
        %917 = vrot.lane.b32.xlu0 %v739, 126
        %v918 = vpop.permute.xlu0 %917
        %919 = vrot.lane.b32.xlu0 %v740, 126
        %v920 = vpop.permute.xlu0 %919
        %v921 = vsel %vm914, %v918, %v920
        %v922 = vsel %vm914, %v920, %v918
        %s923 = sld [smem:[#allocation6 + $0x5]]
        %v924 = vstv %s923
        %v925 = vmul.f32 %v915, %v924
        %v926 = vmul.f32 %v916, %v924
        %s927 = sld [smem:[#allocation6 + $0x85]]
        %v928 = vstv %s927
        %v929 = vmul.f32 %v921, %v928
        %v930 = vmul.f32 %v922, %v928
        %v931 = vadd.f32 %v925, %v929
        %v932 = vadd.f32 %v926, %v930
        %v933 = vadd.s32 %v278, 2
        %v934 = vadd.s32 %v719, 2
        %vm935 = vcmp.ge.s32.totalorder %v933, 0
        %vm936 = vcmp.ge.s32.totalorder %v934, 0
        %vm937 = vcmp.lt.s32.totalorder %v933, 256
        %vm938 = vcmp.lt.s32.totalorder %v934, 256
        %vm939 = vmand %vm935, %vm937
        %vm940 = vmand %vm936, %vm938
        %v941 = vsel %vm939, %v931, 0.0
        %v942 = vsel %vm940, %v932, 0.0
        %v943 = vadd.f32 %v908, %v941
        %v944 = vadd.f32 %v909, %v942
        %945 = vrot.lane.b32.xlu0 %v724, 125
        %v946 = vpop.permute.xlu0 %945
        %947 = vrot.lane.b32.xlu0 %v725, 125
        %v948 = vpop.permute.xlu0 %947
        %vm949 = vcmp.lt.s32.totalorder %v278, 125
        %v950 = vsel %vm949, %v946, %v948
        %v951 = vsel %vm949, %v948, %v946
        %952 = vrot.lane.b32.xlu0 %v739, 125
        %v953 = vpop.permute.xlu0 %952
        %954 = vrot.lane.b32.xlu0 %v740, 125
        %v955 = vpop.permute.xlu0 %954
        %v956 = vsel %vm949, %v953, %v955
        %v957 = vsel %vm949, %v955, %v953
        %s958 = sld [smem:[#allocation6 + $0x6]]
        %v959 = vstv %s958
        %v960 = vmul.f32 %v950, %v959
        %v961 = vmul.f32 %v951, %v959
        %s962 = sld [smem:[#allocation6 + $0x86]]
        %v963 = vstv %s962
        %v964 = vmul.f32 %v956, %v963
        %v965 = vmul.f32 %v957, %v963
        %v966 = vadd.f32 %v960, %v964
        %v967 = vadd.f32 %v961, %v965
        %v968 = vadd.s32 %v278, 3
        %v969 = vadd.s32 %v719, 3
        %vm970 = vcmp.ge.s32.totalorder %v968, 0
        %vm971 = vcmp.ge.s32.totalorder %v969, 0
        %vm972 = vcmp.lt.s32.totalorder %v968, 256
        %vm973 = vcmp.lt.s32.totalorder %v969, 256
        %vm974 = vmand %vm970, %vm972
        %vm975 = vmand %vm971, %vm973
        %v976 = vsel %vm974, %v966, 0.0
        %v977 = vsel %vm975, %v967, 0.0
        %v978 = vadd.f32 %v943, %v976
        %v979 = vadd.f32 %v944, %v977
        %v980 = vxor.u32 %v978, 2147483648
        %v981 = vxor.u32 %v979, 2147483648
        %v982 = vmul.f32 %v980, 1.442695
        %v983 = vpow.pop %v982
        %v984 = vmul.f32 %v981, 1.442695
        %v985 = vpow.pop %v984
        %v986 = vadd.f32 %v983, 1.0
        %v987 = vadd.f32 %v985, 1.0
        %v988 = vrcp.pop %v986
        %v989 = vmul.f32 1.0, %v988
        %v990 = vrcp.pop %v987
        %v991 = vmul.f32 1.0, %v990
        %v994 = vcombine.low %v989, %v991
        %v996 = vunpack.c.l.s4 1966171168
        %v997 = vunpack.c.0.s8 %v996
        %v998 = vlaneseq
        %v999 = vshrl.u32 %v998, 7
        %v1000 = vsub.s32 %v997, %v999
        %v1001 = vrot.slane %v994, %v1000
        %v1002 = vcombine.high %v1001, %v1001
        %v1004 = vunpack.c.l.s4 1966171168
        %v1005 = vunpack.c.0.s8 %v1004
        %v1006 = vlaneseq
        %v1007 = vshrl.u32 %v1006, 7
        %v1008 = vsub.s32 %v1005, %v1007
        %v1009 = vrot.slane %v1001, %v1008
        %v1011 = vunpack.c.l.s4 1966171168
        %v1012 = vunpack.c.0.s8 %v1011
        %v1013 = vlaneseq
        %v1014 = vshrl.u32 %v1013, 7
        %v1015 = vsub.s32 %v1012, %v1014
        %v1016 = vrot.slane %v1002, %v1015
        %v1017 = vlaneseq
        %v1018 = vshrl.u32 %v1017, 7
        %v1019 = vsub.s32 0, %v1018
        %v1020 = vrot.slane %v1009, %v1019
        %v1021 = vlaneseq
        %v1022 = vshrl.u32 %v1021, 7
        %v1023 = vsub.s32 1, %v1022
        %v1024 = vrot.slane %v1009, %v1023
        %v1025 = vlaneseq
        %v1026 = vshrl.u32 %v1025, 7
        %v1027 = vsub.s32 0, %v1026
        %v1028 = vrot.slane %v1016, %v1027
        %v1029 = vlaneseq
        %v1030 = vshrl.u32 %v1029, 7
        %v1031 = vsub.s32 1, %v1030
        %v1032 = vrot.slane %v1016, %v1031
        %v1037 = vmul.f32 %v650, %v1020
        %v1038 = vmul.f32 %v651, %v1024
        %v1039 = vmul.f32 %v652, %v1020
        %v1040 = vmul.f32 %v653, %v1024
        %v1041 = vmul.f32 %v654, %v1028
        %v1042 = vmul.f32 %v655, %v1032
        %v1043 = vmul.f32 %v656, %v1028
        %v1044 = vmul.f32 %v657, %v1032
        %1045 = vst [vmem:[%s230] sm:$0xff] %v1037
        %1046 = vst [vmem:[%s230 + $0x8] sm:$0xff] %v1038
        %1047 = vst [vmem:[%s230 + $0x10] sm:$0xff] %v1039
        %1048 = vst [vmem:[%s230 + $0x18] sm:$0xff] %v1040
        %1049 = vst [vmem:[%s230 + $0x20] sm:$0xff] %v1041
        %1050 = vst [vmem:[%s230 + $0x28] sm:$0xff] %v1042
        %1051 = vst [vmem:[%s230 + $0x30] sm:$0xff] %v1043
        %1052 = vst [vmem:[%s230 + $0x38] sm:$0xff] %v1044
        %s1053 = sand.u32 %s119, 1
        %s1054 = scalar_lea.sflag [#allocation4], %s1053
        %s1055 = sand.u32 %s119, 1
        %s1056 = smul.addr %s1055, 64
        %s1057 = scalar_lea.vmem [#allocation7], %s1056
        // Predicated region
        $region45: #{tpu_custom_call.1} parent=35 // pred_check
          %p1058 = pneg %p129
        $region46: #{tpu_custom_call.1} parent=35 // pred_check_branch
          %1060 = sbr.rel (%p1058) target = $region48
        $region47: #{tpu_custom_call.1} parent=35 // pred_region
          %s1061 = smul.u32 2, %s22
          %s1063 = ssub.s32 1024, 1024
          %1064 = vsyncadd %s1054, %s1063
          %s1065 = smul.addr %s1061, 4
          %s1066 = smul.addr %s1065, 128
          %s1067 = scalar_lea.hbm %s4, %s1066
          %s1068 = sshll.u32 %s1057, 4
          %s1069 = int_to_ptr.vmem [resolvable:$true] %s1068
          %1074 = dma.vmem_to_hbm [thread:$0]  %s1069, 1024, %s1067, %s1054, 256, 256, 16
        $region48: #{tpu_custom_call.1} parent=35 // pred_fallthru
          _
      $region36: #{tpu_custom_call.1} parent=5 // pred_fallthru
        _
      %p1075 = scmp.le.s32.totalorder 2, %s17
      // Predicated region
      $region49: #{tpu_custom_call.1} parent=5 // pred_check
        %p1076 = pneg %p1075
      $region50: #{tpu_custom_call.1} parent=5 // pred_check_branch
        %1078 = sbr.rel (%p1076) target = $region52
      $region51: #{tpu_custom_call.1} parent=5 // pred_region
        %s1079 = ssub.s32 %s17, 2
        // Predicated region
        $region53: #{tpu_custom_call.1} parent=51 // pred_check
          %p1080 = pneg %p135
        $region54: #{tpu_custom_call.1} parent=51 // pred_check_branch
          %1082 = sbr.rel (%p1080) target = $region56
        $region55: #{tpu_custom_call.1} parent=51 // pred_region
          %s1083 = sand.u32 %s120, 1
          %s1084 = scalar_lea.sflag [#allocation4], %s1083
          %s1085 = sand.u32 %s120, 1
          %s1086 = smul.addr %s1085, 64
          %s1087 = scalar_lea.vmem [#allocation7], %s1086
          %1088 = dma.done %s1084, 1024
        $region56: #{tpu_custom_call.1} parent=51 // pred_fallthru
          _
      $region52: #{tpu_custom_call.1} parent=5 // pred_fallthru
        _
    $region6: #{tpu_custom_call.1} parent=1 // loop_footer
      %s21 = sadd.s32 1, %s17
    $region7: #{tpu_custom_call.1} parent=1 // loop_footer_branch
      %16 = sbr.rel target = $region3
    $region8: #{tpu_custom_call.1} parent=1 // loop_exit
      _
    %1089 = vsyncpa [#allocation3], 1
    %s1090 = scalar_lea.sflag [#allocation3], 1
    %1091 = vsyncpa %s1090, 1
    %1092 = vsyncpa [#allocation4], 1
    %s1093 = scalar_lea.sflag [#allocation4], 1
    %1094 = vsyncpa %s1093, 1
    %1095 = vsyncpa [#allocation5], 1
    %s1096 = scalar_lea.sflag [#allocation5], 1
    %1097 = vsyncpa %s1096, 1

</llo_original>
